<compile_context>
chip_gen: v7x
topology: tpu7x:2x2x1
jax: 0.10.0
libtpu: 0.0.40
codegen_flags: <defaults>
</compile_context>

<pallas_src>
import math

import jax
import jax.numpy as jnp
from jax.experimental import pallas as pl
from jax.experimental.pallas import tpu as pltpu


def _round_up(x: int, m: int) -> int:
    return (x + m - 1) // m * m


_VMEM_LIMIT = 32 * 1024 * 1024  # safe on v5e/v6e (128 MiB) and v7x (64 MiB)


# ---------------------------------------------------------------------------
# Kernel 1: tiled linear  y = x @ W + b   (Q/K/V in-projections, out-proj)
# ---------------------------------------------------------------------------
def _linear_kernel(x_ref, w_ref, b_ref, o_ref):
    acc = jnp.dot(x_ref[...], w_ref[...], preferred_element_type=jnp.float32)
    o_ref[...] = (acc + b_ref[...]).astype(o_ref.dtype)


def _linear(x2d, w, b, *, tm: int = 128, tn: int = 128):
    """(M, K) @ (K, N) + (N,) -> (M, N), MXU-tiled, rows padded as needed."""
    M, K = x2d.shape
    N = w.shape[1]

    # Row tile: MXU-matched 128 (fall back to a full, 8-aligned block for tiny
    # M).  Column tile: lane-dense 128 when divisible, else the full N block.
    tm = min(tm, _round_up(M, 8))
    tn = tn if N % tn == 0 else N
    Mp = _round_up(M, tm)
    if Mp != M:
        x2d = jnp.pad(x2d, ((0, Mp - M), (0, 0)))

    out = pl.pallas_call(
        _linear_kernel,
        out_shape=jax.ShapeDtypeStruct((Mp, N), x2d.dtype),
        grid=(Mp // tm, N // tn),
        in_specs=[
            pl.BlockSpec((tm, K), lambda i, j: (i, 0)),   # x row tile
            pl.BlockSpec((K, tn), lambda i, j: (0, j)),   # weight column tile
            pl.BlockSpec((1, tn), lambda i, j: (0, j)),   # bias
        ],
        out_specs=pl.BlockSpec((tm, tn), lambda i, j: (i, j)),
        compiler_params=pltpu.CompilerParams(
            dimension_semantics=("parallel", "parallel"),
            vmem_limit_bytes=_VMEM_LIMIT),
    )(x2d, w, b.reshape(1, N))
    return out[:M]


# ---------------------------------------------------------------------------
# Kernel 2: multi-head attention core (flash-style online softmax)
#   q: (B*H, Sq, Dh)  k,v: (B*H, Sk, Dh)  ->  (B*H, Sq, Dh)
#   q already carries the 1/sqrt(Dh) scale (folded into the projection).
# ---------------------------------------------------------------------------
def _mha_core_kernel(q_ref, k_ref, v_ref, o_ref, m_sc, l_sc, acc_sc):
    ki = pl.program_id(2)

    @pl.when(ki == 0)
    def _():
        m_sc[...] = jnp.full(m_sc.shape, -jnp.inf, m_sc.dtype)
        l_sc[...] = jnp.zeros(l_sc.shape, l_sc.dtype)
        acc_sc[...] = jnp.zeros(acc_sc.shape, acc_sc.dtype)

    # (1, tq, Dh) x (1, tk, Dh) -> (1, tq, tk)
    s = jnp.einsum("bqd,bkd->bqk", q_ref[...], k_ref[...],
                   preferred_element_type=jnp.float32)
    m_new = jnp.maximum(m_sc[...], s.max(axis=-1, keepdims=True))
    alpha = jnp.exp(m_sc[...] - m_new)
    p = jnp.exp(s - m_new)
    l_sc[...] = alpha * l_sc[...] + p.sum(axis=-1, keepdims=True)
    acc_sc[...] = alpha * acc_sc[...] + jnp.einsum(
        "bqk,bkd->bqd", p.astype(v_ref.dtype), v_ref[...],
        preferred_element_type=jnp.float32)
    m_sc[...] = m_new

    @pl.when(ki == pl.num_programs(2) - 1)
    def _():
        o_ref[...] = (acc_sc[...] / l_sc[...]).astype(o_ref.dtype)


def _mha_core(q, k, v, *, tq: int = 128, tk: int = 128):
    BH, Sq, Dh = q.shape
    Sk = k.shape[1]
    tq = tq if Sq % tq == 0 else Sq
    tk = tk if Sk % tk == 0 else Sk

    return pl.pallas_call(
        _mha_core_kernel,
        out_shape=jax.ShapeDtypeStruct((BH, Sq, Dh), q.dtype),
        grid=(BH, Sq // tq, Sk // tk),
        in_specs=[
            pl.BlockSpec((1, tq, Dh), lambda b, qi, ki: (b, qi, 0)),
            pl.BlockSpec((1, tk, Dh), lambda b, qi, ki: (b, ki, 0)),
            pl.BlockSpec((1, tk, Dh), lambda b, qi, ki: (b, ki, 0)),
        ],
        out_specs=pl.BlockSpec((1, tq, Dh), lambda b, qi, ki: (b, qi, 0)),
        scratch_shapes=[
            pltpu.VMEM((1, tq, 1), jnp.float32),    # running max
            pltpu.VMEM((1, tq, 1), jnp.float32),    # running denominator
            pltpu.VMEM((1, tq, Dh), jnp.float32),   # running numerator
        ],
        compiler_params=pltpu.CompilerParams(
            dimension_semantics=("parallel", "parallel", "arbitrary"),
            vmem_limit_bytes=_VMEM_LIMIT),
    )(q, k, v)


# ---------------------------------------------------------------------------
# JAX/Pallas counterpart of the PyTorch wrapper module
# ---------------------------------------------------------------------------
class MultiheadAttention:
    """Mirrors setquence.base.attention.MultiheadAttention (inference).

    Like the PyTorch wrapper, attn_mask / key_padding_mask / need_weights are
    accepted but ignored (the original calls `self.MHA(query, key, value)`
    without forwarding them)."""

    def __init__(self, embed_dim, num_heads, dropout=0.0, batch_first=True):
        assert embed_dim % num_heads == 0, "embed_dim must divide num_heads"
        self.embed_dim = int(embed_dim)
        self.num_heads = int(num_heads)
        self.head_dim = embed_dim // num_heads
        self.dropout = float(dropout)
        self.batch_first = bool(batch_first)
        # TODO(synk): attention-probability dropout is training-mode-only in
        # torch (module default dropout=0); not implemented here.

        # Deterministic synthetic parameters (torch layout: y = x @ W^T + b).
        E = self.embed_dim
        k0 = jax.random.PRNGKey(0)
        k1, k2, k3, k4 = jax.random.split(k0, 4)
        bound = 1.0 / math.sqrt(E)
        w_in = jax.random.uniform(k1, (3 * E, E), jnp.float32, -bound, bound)
        b_in = jax.random.uniform(k2, (3 * E,), jnp.float32, -bound, bound)
        w_out = jax.random.uniform(k3, (E, E), jnp.float32, -bound, bound)
        b_out = jax.random.uniform(k4, (E,), jnp.float32, -bound, bound)
        self.w_in_T = jnp.transpose(w_in)          # (E, 3E)
        self.b_in = b_in
        self.w_out_T = jnp.transpose(w_out)        # (E, E)
        self.b_out = b_out

        # Fold the 1/sqrt(head_dim) softmax scale into the Q projection once
        # on the host -> zero per-step VPU cost inside the kernels.
        scale = 1.0 / math.sqrt(self.head_dim)
        self._wq_T = self.w_in_T[:, :E] * scale
        self._bq = self.b_in[:E] * scale
        self._wk_T = self.w_in_T[:, E:2 * E]
        self._bk = self.b_in[E:2 * E]
        self._wv_T = self.w_in_T[:, 2 * E:]
        self._bv = self.b_in[2 * E:]

    # ---- core path, batch-first (B, N, E) ---------------------------------
    def _attention_batch_first(self, query, key, value):
        B, Nq, E = query.shape
        Nk = key.shape[1]
        H, Dh = self.num_heads, self.head_dim

        q = _linear(query.reshape(B * Nq, E), self._wq_T, self._bq)
        k = _linear(key.reshape(B * Nk, E), self._wk_T, self._bk)
        v = _linear(value.reshape(B * Nk, E), self._wv_T, self._bv)

        def split_heads(x, n):
            return (x.reshape(B, n, H, Dh).transpose(0, 2, 1, 3)
                     .reshape(B * H, n, Dh))

        o = _mha_core(split_heads(q, Nq), split_heads(k, Nk),
                      split_heads(v, Nk))

        o = (o.reshape(B, H, Nq, Dh).transpose(0, 2, 1, 3)
              .reshape(B * Nq, E))
        out = _linear(o, self.w_out_T, self.b_out)
        return out.reshape(B, Nq, E)

    def __call__(self, query, key, value, attn_mask=None,
                 key_padding_mask=None, need_weights=False):
        del attn_mask, key_padding_mask, need_weights   # ignored, as in torch wrapper
        is_batched = query.ndim == 3
        if not is_batched:                              # (N, E) unbatched
            q, k, v = (x[None] for x in (query, key, value))
        elif self.batch_first:                          # (B, N, E)
            q, k, v = query, key, value
        else:                                           # (N, B, E) seq-first
            q, k, v = (jnp.swapaxes(x, 0, 1) for x in (query, key, value))

        out = self._attention_batch_first(q, k, v)

        if not is_batched:
            return out[0]
        if self.batch_first:
            return out
        return jnp.swapaxes(out, 0, 1)

    # ---- pure-jnp reference (batch-first, batched) for validation ---------
    def reference(self, query, key, value):
        B, Nq, E = query.shape
        Nk = key.shape[1]
        H, Dh = self.num_heads, self.head_dim
        q = query @ self.w_in_T[:, :E] + self.b_in[:E]
        k = key @ self.w_in_T[:, E:2 * E] + self.b_in[E:2 * E]
        v = value @ self.w_in_T[:, 2 * E:] + self.b_in[2 * E:]
        q = q.reshape(B, Nq, H, Dh).transpose(0, 2, 1, 3)
        k = k.reshape(B, Nk, H, Dh).transpose(0, 2, 1, 3)
        v = v.reshape(B, Nk, H, Dh).transpose(0, 2, 1, 3)
        s = jnp.einsum("bhqd,bhkd->bhqk", q, k) / math.sqrt(Dh)
        a = jax.nn.softmax(s, axis=-1)
        o = jnp.einsum("bhqk,bhkd->bhqd", a, v)
        o = o.transpose(0, 2, 1, 3).reshape(B, Nq, E)
        return o @ self.w_out_T + self.b_out


# ---------------------------------------------------------------------------
if __name__ == "__main__":
    # Small but lane-dense shapes: seq and head_dim are multiples of 128 so
    # every MXU tile is full and vector stores are unmasked.
    B, S, E, H = 2, 128, 256, 2      # head_dim = 128

    k0 = jax.random.PRNGKey(0)
    kq, kk, kv = jax.random.split(k0, 3)
    query = jax.random.normal(kq, (B, S, E), dtype=jnp.float32)
    key = jax.random.normal(kk, (B, S, E), dtype=jnp.float32)
    value = jax.random.normal(kv, (B, S, E), dtype=jnp.float32)

    mha = MultiheadAttention(embed_dim=E, num_heads=H, dropout=0.0,
                             batch_first=True)

    out = mha(query, key, value, attn_mask=None, key_padding_mask=None,
              need_weights=False)
    out = jax.block_until_ready(out)
    assert out.shape == (B, S, E) and out.dtype == jnp.float32

    ref = mha.reference(query, key, value)
    assert bool(jnp.allclose(out, ref, atol=1e-2, rtol=2e-2)), (
        "Pallas MHA mismatch vs reference, max |diff| = "
        f"{float(jnp.max(jnp.abs(out - ref)))}")

    print("KERNEL_OK")
</pallas_src>

<mosaic_0001>
module attributes {stable_mosaic.version = 11 : i64} {
  func.func @_linear_kernel(%arg0: i32, %arg1: i32, %arg2: memref<128x256xf32, #tpu.memory_space<vmem>>, %arg3: memref<256x128xf32, #tpu.memory_space<vmem>>, %arg4: memref<1x128xf32, #tpu.memory_space<vmem>>, %arg5: memref<128x128xf32, #tpu.memory_space<vmem>>) attributes {dimension_semantics = [#tpu.dimension_semantics<parallel>, #tpu.dimension_semantics<parallel>], iteration_bounds = array<i64: 2, 2>, scalar_prefetch = 0 : i64, scratch_operands = 0 : i64, tpu.core_type = #tpu.core_type<tc>, window_params = [{transform_indices = @transform_0, window_bounds = array<i64: 128, 256>}, {transform_indices = @transform_1, window_bounds = array<i64: 256, 128>}, {transform_indices = @transform_2, window_bounds = array<i64: 1, 128>}, {transform_indices = @transform_3, window_bounds = array<i64: 128, 128>}]} {
    %c0 = arith.constant 0 : index
    %c0_0 = arith.constant 0 : index
    %0 = vector.load %arg2[%c0, %c0_0] : memref<128x256xf32, #tpu.memory_space<vmem>>, vector<128x256xf32>
    %c0_1 = arith.constant 0 : index
    %c0_2 = arith.constant 0 : index
    %1 = vector.load %arg3[%c0_1, %c0_2] : memref<256x128xf32, #tpu.memory_space<vmem>>, vector<256x128xf32>
    %cst = arith.constant dense<0.000000e+00> : vector<128x128xf32>
    %2 = tpu.matmul %0, %1, %cst {dimension_numbers = #tpu.dot_dimension_numbers<[1], [0], [0], [1], [0, 0, 1, 1], [], []>} : vector<128x256xf32>, vector<256x128xf32>, vector<128x128xf32> -> vector<128x128xf32>
    %c0_3 = arith.constant 0 : index
    %c0_4 = arith.constant 0 : index
    %3 = vector.load %arg4[%c0_3, %c0_4] : memref<1x128xf32, #tpu.memory_space<vmem>>, vector<1x128xf32>
    %4 = vector.broadcast %3 : vector<1x128xf32> to vector<128x128xf32>
    %5 = arith.addf %2, %4 : vector<128x128xf32>
    %c0_5 = arith.constant 0 : index
    %c0_6 = arith.constant 0 : index
    %6 = vector.load %arg5[%c0_5, %c0_6] : memref<128x128xf32, #tpu.memory_space<vmem>>, vector<128x128xf32>
    tpu.vector_store %arg5[%c0_5, %c0_6], %5 {strides = array<i32>} : memref<128x128xf32, #tpu.memory_space<vmem>>, vector<128x128xf32>,
    return
  }
  func.func @transform_0(%arg0: i32, %arg1: i32) -> (i32, i32) {
    %c0_i32 = arith.constant 0 : i32
    %c0_i32_0 = arith.constant 0 : i32
    return %arg0, %c0_i32 : i32, i32
  }
  func.func @transform_1(%arg0: i32, %arg1: i32) -> (i32, i32) {
    %c0_i32 = arith.constant 0 : i32
    %c0_i32_0 = arith.constant 0 : i32
    return %c0_i32, %arg1 : i32, i32
  }
  func.func @transform_2(%arg0: i32, %arg1: i32) -> (i32, i32) {
    %c0_i32 = arith.constant 0 : i32
    %c0_i32_0 = arith.constant 0 : i32
    return %c0_i32, %arg1 : i32, i32
  }
  func.func @transform_3(%arg0: i32, %arg1: i32) -> (i32, i32) {
    %c0_i32 = arith.constant 0 : i32
    return %arg0, %arg1 : i32, i32
  }
}

</mosaic_0001>

<llo_original>
// kernel: tpu_custom_call.1
$region0: #{tpu_custom_call.1}
  #allocation0 [shape = 'u32[]', space=smem, size = 0x4, offset = 0x4, fixed_abs, tag = 'smem constant byte address 0x4 - core index']
  #allocation1 [shape = 'u32[144,128]{1,0:T(1,128)}', space=vmem, size = 0x12000, scoped, tag = 'internal scratch']
  %s0 = inlined_call_operand.hbm [shape: f32[256,256], index: 0, kind: input, shape index: {}]
  %s1 = inlined_call_operand.hbm [shape: f32[256,256], index: 1, kind: input, shape index: {}]
  %s2 = inlined_call_operand.vmem [shape: f32[1,256], index: 2, kind: input, shape index: {}]
  %s3 = inlined_call_operand.hbm [shape: f32[256,256], index: 3, kind: output, shape index: {}]
  %s4 = sld [smem:[#allocation0]]
  $region53: #{tpu_custom_call.1} parent=0
    _
  %s6 = ssub.s32 1, %s4
  %s7 = scalar_select 0, %s6, %s4
  $region1: #{tpu_custom_call.1} parent=0
    #allocation2 [shape = 'u8[262144]{0}', space=vmem, size = 0x40000, scoped, tag = 'input window, operand 0']
    #allocation3 [shape = 's32[2]{0}', space=sflag, size = 0x8, scoped, tag = 'scoped memory for tpu_custom_call.1']
    #allocation4 [shape = 's32[2]{0}', space=sflag, size = 0x8, scoped, tag = 'scoped memory for tpu_custom_call.1']
    #allocation5 [shape = 'u8[262144]{0}', space=vmem, size = 0x40000, scoped, tag = 'input window, operand 1']
    #allocation6 [shape = 's32[2]{0}', space=sflag, size = 0x8, scoped, tag = 'scoped memory for tpu_custom_call.1']
    #allocation7 [shape = 'u8[131072]{0}', space=vmem, size = 0x20000, scoped, tag = 'output window, operand 0']
    %8 = vsyncpa [#allocation3], 0
    %s9 = scalar_lea.sflag [#allocation3], 1
    %10 = vsyncpa %s9, 0
    %11 = vsyncpa [#allocation6], 0
    %s12 = scalar_lea.sflag [#allocation6], 1
    %13 = vsyncpa %s12, 0
    %14 = vsyncpa [#allocation4], 0
    %s15 = scalar_lea.sflag [#allocation4], 1
    %16 = vsyncpa %s15, 0
    loop: start=0, step=1, limit=6
    $region2: #{tpu_custom_call.1} parent=1 // loop_pre_header
      _
    $region3: #{tpu_custom_call.1} parent=1 // loop_header
      %s18 = sphi 0, %s22
      %p19 = scmp.ge.s32.totalorder %s18, 6
      %s25 = sphi 0, %s37
      %s26 = sphi 0, %s33
      %s27 = sphi 0, %s25
      %s28 = sphi 0, %s26
      %s29 = sphi 0, %s27
      %s30 = sphi 0, %s28
      %s40 = sphi 0, %s42
      %s43 = sphi 0, %s40
      %s44 = sphi 0, %s43
      %s60 = sphi 0, %s44
      %s66 = sphi 0, %s68
      %s69 = sphi 0, %s66
      %s70 = sphi 0, %s69
      %s86 = sphi 0, %s70
      %s92 = sphi 0, %s94
      %s95 = sphi 0, %s92
      %s96 = sphi 0, %s95
      %s112 = sphi 0, %s96
      %s120 = sphi 0, %s122
      %s123 = sphi 0, %s120
      %s124 = sphi 0, %s123
      %s140 = sphi 0, %s124
    $region4: #{tpu_custom_call.1} parent=1 // loop_header_branch
      %21 = sbr.rel (%p19) target = $region8
    $region5: #{tpu_custom_call.1} parent=1 // loop_body
      %s23 = ssub.s32 %s18, 1
      %s24 = ssub.s32 %s18, 2
      %s31 = sadd.s32 1, %s26
      %p32 = scmp.ge.s32.totalorder %s31, 2
      %s33 = scalar_select %p32, 0, %s31
      %s34 = sadd.s32 1, %s25
      %s35 = scalar_select %p32, %s34, %s25
      %p36 = scmp.ge.s32.totalorder %s35, 2
      %s37 = scalar_select %p36, 0, %s35
      %s38 = ssub.s32 %s25, %s37
      %p39 = scmp.eq.s32.totalorder %s38, 0
      %s41 = sadd.s32 %s40, 1
      %s42 = scalar_select %p39, %s40, %s41
      %p45 = pneg %p39
      %p46 = scmp.eq.s32.totalorder %s18, 3
      %p47 = por %p45, %p46
      %p48 = scmp.ne.s32.totalorder %s40, %s43
      %p49 = scmp.eq.s32.totalorder %s18, 0
      %p50 = por %p48, %p49
      %p51 = scmp.ne.s32.totalorder %s40, %s43
      %p52 = scmp.eq.s32.totalorder %s23, 3
      %p53 = por %p51, %p52
      %p54 = scmp.ne.s32.totalorder %s43, %s44
      %p55 = scmp.eq.s32.totalorder %s23, 0
      %p56 = por %p54, %p55
      %p57 = scmp.ne.s32.totalorder %s43, %s44
      %p58 = scmp.eq.s32.totalorder %s24, 3
      %p59 = por %p57, %p58
      %p61 = scmp.ne.s32.totalorder %s44, %s60
      %p62 = scmp.eq.s32.totalorder %s24, 0
      %p63 = por %p61, %p62
      %s64 = ssub.s32 %s26, %s33
      %p65 = scmp.eq.s32.totalorder %s64, 0
      %s67 = sadd.s32 %s66, 1
      %s68 = scalar_select %p65, %s66, %s67
      %p71 = pneg %p65
      %p72 = scmp.eq.s32.totalorder %s18, 3
      %p73 = por %p71, %p72
      %p74 = scmp.ne.s32.totalorder %s66, %s69
      %p75 = scmp.eq.s32.totalorder %s18, 0
      %p76 = por %p74, %p75
      %p77 = scmp.ne.s32.totalorder %s66, %s69
      %p78 = scmp.eq.s32.totalorder %s23, 3
      %p79 = por %p77, %p78
      %p80 = scmp.ne.s32.totalorder %s69, %s70
      %p81 = scmp.eq.s32.totalorder %s23, 0
      %p82 = por %p80, %p81
      %p83 = scmp.ne.s32.totalorder %s69, %s70
      %p84 = scmp.eq.s32.totalorder %s24, 3
      %p85 = por %p83, %p84
      %p87 = scmp.ne.s32.totalorder %s70, %s86
      %p88 = scmp.eq.s32.totalorder %s24, 0
      %p89 = por %p87, %p88
      %s90 = ssub.s32 %s26, %s33
      %p91 = scmp.eq.s32.totalorder %s90, 0
      %s93 = sadd.s32 %s92, 1
      %s94 = scalar_select %p91, %s92, %s93
      %p97 = pneg %p91
      %p98 = scmp.eq.s32.totalorder %s18, 3
      %p99 = por %p97, %p98
      %p100 = scmp.ne.s32.totalorder %s92, %s95
      %p101 = scmp.eq.s32.totalorder %s18, 0
      %p102 = por %p100, %p101
      %p103 = scmp.ne.s32.totalorder %s92, %s95
      %p104 = scmp.eq.s32.totalorder %s23, 3
      %p105 = por %p103, %p104
      %p106 = scmp.ne.s32.totalorder %s95, %s96
      %p107 = scmp.eq.s32.totalorder %s23, 0
      %p108 = por %p106, %p107
      %p109 = scmp.ne.s32.totalorder %s95, %s96
      %p110 = scmp.eq.s32.totalorder %s24, 3
      %p111 = por %p109, %p110
      %p113 = scmp.ne.s32.totalorder %s96, %s112
      %p114 = scmp.eq.s32.totalorder %s24, 0
      %p115 = por %p113, %p114
      %s116 = ssub.s32 %s25, %s37
      %s117 = ssub.s32 %s26, %s33
      %s118 = sor.u32 %s116, %s117
      %p119 = scmp.eq.s32.totalorder %s118, 0
      %s121 = sadd.s32 %s120, 1
      %s122 = scalar_select %p119, %s120, %s121
      %p125 = pneg %p119
      %p126 = scmp.eq.s32.totalorder %s18, 3
      %p127 = por %p125, %p126
      %p128 = scmp.ne.s32.totalorder %s120, %s123
      %p129 = scmp.eq.s32.totalorder %s18, 0
      %p130 = por %p128, %p129
      %p131 = scmp.ne.s32.totalorder %s120, %s123
      %p132 = scmp.eq.s32.totalorder %s23, 3
      %p133 = por %p131, %p132
      %p134 = scmp.ne.s32.totalorder %s123, %s124
      %p135 = scmp.eq.s32.totalorder %s23, 0
      %p136 = por %p134, %p135
      %p137 = scmp.ne.s32.totalorder %s123, %s124
      %p138 = scmp.eq.s32.totalorder %s24, 3
      %p139 = por %p137, %p138
      %p141 = scmp.ne.s32.totalorder %s124, %s140
      %p142 = scmp.eq.s32.totalorder %s24, 0
      %p143 = por %p141, %p142
      %p144 = scmp.le.s32.totalorder 1, %s18
      %p145 = scmp.lt.s32.totalorder %s18, 5
      %p146 = pnand %p144, %p145
      %p147 = pneg %p146
      // Predicated region
      $region9: #{tpu_custom_call.1} parent=5 // pred_check
        _
      $region10: #{tpu_custom_call.1} parent=5 // pred_check_branch
        %149 = sbr.rel (%p146) target = $region12
      $region11: #{tpu_custom_call.1} parent=5 // pred_region
        %s150 = ssub.s32 %s18, 1
      $region12: #{tpu_custom_call.1} parent=5 // pred_fallthru
        _
      %p151 = scmp.lt.s32.totalorder %s18, 4
      // Predicated region
      $region13: #{tpu_custom_call.1} parent=5 // pred_check
        %p152 = pneg %p151
      $region14: #{tpu_custom_call.1} parent=5 // pred_check_branch
        %154 = sbr.rel (%p152) target = $region16
      $region15: #{tpu_custom_call.1} parent=5 // pred_region
        // Predicated region
        $region17: #{tpu_custom_call.1} parent=15 // pred_check
          %p155 = pneg %p50
        $region18: #{tpu_custom_call.1} parent=15 // pred_check_branch
          %157 = sbr.rel (%p155) target = $region20
        $region19: #{tpu_custom_call.1} parent=15 // pred_region
          %s158 = sand.u32 %s40, 1
          %s159 = scalar_lea.sflag [#allocation3], %s158
          %s160 = sand.u32 %s40, 1
          %s161 = smul.addr %s160, 256
          %s162 = scalar_lea.vmem [#allocation2], %s161
          %s163 = smul.u32 16, %s25
          %s165 = ssub.s32 4096, 4096
          %166 = vsyncadd %s159, %s165
          %s167 = smul.addr %s163, 2
          %s168 = smul.addr %s167, 128
          %s169 = scalar_lea.hbm %s0, %s168
          %s170 = sshll.u32 %s162, 4
          %s171 = int_to_ptr.vmem [resolvable:$true] %s170
          %176 = dma.hbm_to_vmem [thread:$0]  %s169, 4096, %s171, %s159, 256, 256, 16
        $region20: #{tpu_custom_call.1} parent=15 // pred_fallthru
          _
        // Predicated region
        $region21: #{tpu_custom_call.1} parent=15 // pred_check
          %p177 = pneg %p76
        $region22: #{tpu_custom_call.1} parent=15 // pred_check_branch
          %179 = sbr.rel (%p177) target = $region24
        $region23: #{tpu_custom_call.1} parent=15 // pred_region
          %s180 = sand.u32 %s66, 1
          %s181 = scalar_lea.sflag [#allocation6], %s180
          %s182 = sand.u32 %s66, 1
          %s183 = smul.addr %s182, 256
          %s184 = scalar_lea.vmem [#allocation5], %s183
          %s186 = ssub.s32 4096, 4096
          %187 = vsyncadd %s181, %s186
          %s188 = smul.addr %s26, 128
          %s189 = scalar_lea.hbm %s1, %s188
          %s190 = sshll.u32 %s184, 4
          %s191 = int_to_ptr.vmem [resolvable:$true] %s190
          %196 = dma.hbm_to_vmem [thread:$0]  %s189, 4096, %s191, %s181, 256, 128, 8
        $region24: #{tpu_custom_call.1} parent=15 // pred_fallthru
          _
        // Predicated region
        $region25: #{tpu_custom_call.1} parent=15 // pred_check
          %p197 = pneg %p102
        $region26: #{tpu_custom_call.1} parent=15 // pred_check_branch
          %199 = sbr.rel (%p197) target = $region28
        $region27: #{tpu_custom_call.1} parent=15 // pred_region
          %p200 = scmp.lt.s32.totalorder %s26, 1
          %s201 = scalar_select %p200, %s26, 1
          %s202 = scalar_lea.vmem %s2, %s201
        $region28: #{tpu_custom_call.1} parent=15 // pred_fallthru
          _
      $region16: #{tpu_custom_call.1} parent=5 // pred_fallthru
        _
      %p203 = scmp.le.s32.totalorder 1, %s18
      %p204 = scmp.lt.s32.totalorder %s18, 5
      %p205 = pnand %p203, %p204
      %p206 = pneg %p205
      // Predicated region
      $region29: #{tpu_custom_call.1} parent=5 // pred_check
        _
      $region30: #{tpu_custom_call.1} parent=5 // pred_check_branch
        %208 = sbr.rel (%p205) target = $region32
      $region31: #{tpu_custom_call.1} parent=5 // pred_region
        %s209 = ssub.s32 %s18, 1
        %s210 = sand.u32 %s43, 1
        %s211 = scalar_lea.sflag [#allocation3], %s210
        %s212 = sand.u32 %s43, 1
        %s213 = smul.addr %s212, 256
        %s214 = scalar_lea.vmem [#allocation2], %s213
        // Predicated region
        $region33: #{tpu_custom_call.1} parent=31 // pred_check
          %p215 = pneg %p56
        $region34: #{tpu_custom_call.1} parent=31 // pred_check_branch
          %217 = sbr.rel (%p215) target = $region36
        $region35: #{tpu_custom_call.1} parent=31 // pred_region
          %218 = dma.done %s211, 4096
        $region36: #{tpu_custom_call.1} parent=31 // pred_fallthru
          _
        %s219 = sand.u32 %s69, 1
        %s220 = scalar_lea.sflag [#allocation6], %s219
        %s221 = sand.u32 %s69, 1
        %s222 = smul.addr %s221, 256
        %s223 = scalar_lea.vmem [#allocation5], %s222
        // Predicated region
        $region37: #{tpu_custom_call.1} parent=31 // pred_check
          %p224 = pneg %p82
        $region38: #{tpu_custom_call.1} parent=31 // pred_check_branch
          %226 = sbr.rel (%p224) target = $region40
        $region39: #{tpu_custom_call.1} parent=31 // pred_region
          %227 = dma.done %s220, 4096
        $region40: #{tpu_custom_call.1} parent=31 // pred_fallthru
          _
        %s228 = sand.u32 %s43, 1
        %s229 = scalar_lea.sflag [#allocation3], %s228
        %s230 = sand.u32 %s43, 1
        %s231 = smul.addr %s230, 256
        %s232 = scalar_lea.vmem [#allocation2], %s231
        %p233 = pneg %p56
        %p234 = pneg %p53
        %s235 = sand.u32 %s69, 1
        %s236 = scalar_lea.sflag [#allocation6], %s235
        %s237 = sand.u32 %s69, 1
        %s238 = smul.addr %s237, 256
        %s239 = scalar_lea.vmem [#allocation5], %s238
        %p240 = pneg %p82
        %p241 = pneg %p79
        %p242 = scmp.lt.s32.totalorder %s28, 1
        %s243 = scalar_select %p242, %s28, 1
        %s244 = scalar_lea.vmem %s2, %s243
        %p245 = pneg %p108
        %p246 = pneg %p105
        %p247 = pneg %p136
        %p248 = pneg %p133
        %s249 = sand.u32 %s123, 1
        %s250 = scalar_lea.sflag [#allocation4], %s249
        %s251 = sand.u32 %s123, 1
        %s252 = smul.addr %s251, 128
        %s253 = scalar_lea.vmem [#allocation7], %s252
        %s254 = smul.u32 16, %s27
        %p255 = scmp.lt.s32.totalorder %s28, 1
        %s256 = scalar_select %p255, %s28, 1
        %s257 = scalar_lea.vmem %s2, %s256
        %s258 = smul.u32 16, %s27
        %v259 = vld [vmem:[%s214] sm:$0xff]
        %v260 = vld [vmem:[%s214 + $0x8] sm:$0xff]
        %v261 = vld [vmem:[%s214 + $0x10] sm:$0xff]
        %v262 = vld [vmem:[%s214 + $0x18] sm:$0xff]
        %v263 = vld [vmem:[%s214 + $0x20] sm:$0xff]
        %v264 = vld [vmem:[%s214 + $0x28] sm:$0xff]
        %v265 = vld [vmem:[%s214 + $0x30] sm:$0xff]
        %v266 = vld [vmem:[%s214 + $0x38] sm:$0xff]
        %v267 = vld [vmem:[%s214 + $0x40] sm:$0xff]
        %v268 = vld [vmem:[%s214 + $0x48] sm:$0xff]
        %v269 = vld [vmem:[%s214 + $0x50] sm:$0xff]
        %v270 = vld [vmem:[%s214 + $0x58] sm:$0xff]
        %v271 = vld [vmem:[%s214 + $0x60] sm:$0xff]
        %v272 = vld [vmem:[%s214 + $0x68] sm:$0xff]
        %v273 = vld [vmem:[%s214 + $0x70] sm:$0xff]
        %v274 = vld [vmem:[%s214 + $0x78] sm:$0xff]
        %v275 = vld [vmem:[%s214 + $0x80] sm:$0xff]
        %v276 = vld [vmem:[%s214 + $0x88] sm:$0xff]
        %v277 = vld [vmem:[%s214 + $0x90] sm:$0xff]
        %v278 = vld [vmem:[%s214 + $0x98] sm:$0xff]
        %v279 = vld [vmem:[%s214 + $0xa0] sm:$0xff]
        %v280 = vld [vmem:[%s214 + $0xa8] sm:$0xff]
        %v281 = vld [vmem:[%s214 + $0xb0] sm:$0xff]
        %v282 = vld [vmem:[%s214 + $0xb8] sm:$0xff]
        %v283 = vld [vmem:[%s214 + $0xc0] sm:$0xff]
        %v284 = vld [vmem:[%s214 + $0xc8] sm:$0xff]
        %v285 = vld [vmem:[%s214 + $0xd0] sm:$0xff]
        %v286 = vld [vmem:[%s214 + $0xd8] sm:$0xff]
        %v287 = vld [vmem:[%s214 + $0xe0] sm:$0xff]
        %v288 = vld [vmem:[%s214 + $0xe8] sm:$0xff]
        %v289 = vld [vmem:[%s214 + $0xf0] sm:$0xff]
        %v290 = vld [vmem:[%s214 + $0xf8] sm:$0xff]
        %v291 = vld [vmem:[%s223] sm:$0xff]
        %v292 = vld [vmem:[%s223 + $0x8] sm:$0xff]
        %v293 = vld [vmem:[%s223 + $0x10] sm:$0xff]
        %v294 = vld [vmem:[%s223 + $0x18] sm:$0xff]
        %v295 = vld [vmem:[%s223 + $0x20] sm:$0xff]
        %v296 = vld [vmem:[%s223 + $0x28] sm:$0xff]
        %v297 = vld [vmem:[%s223 + $0x30] sm:$0xff]
        %v298 = vld [vmem:[%s223 + $0x38] sm:$0xff]
        %v299 = vld [vmem:[%s223 + $0x40] sm:$0xff]
        %v300 = vld [vmem:[%s223 + $0x48] sm:$0xff]
        %v301 = vld [vmem:[%s223 + $0x50] sm:$0xff]
        %v302 = vld [vmem:[%s223 + $0x58] sm:$0xff]
        %v303 = vld [vmem:[%s223 + $0x60] sm:$0xff]
        %v304 = vld [vmem:[%s223 + $0x68] sm:$0xff]
        %v305 = vld [vmem:[%s223 + $0x70] sm:$0xff]
        %v306 = vld [vmem:[%s223 + $0x78] sm:$0xff]
        %v307 = vld [vmem:[%s223 + $0x80] sm:$0xff]
        %v308 = vld [vmem:[%s223 + $0x88] sm:$0xff]
        %v309 = vld [vmem:[%s223 + $0x90] sm:$0xff]
        %v310 = vld [vmem:[%s223 + $0x98] sm:$0xff]
        %v311 = vld [vmem:[%s223 + $0xa0] sm:$0xff]
        %v312 = vld [vmem:[%s223 + $0xa8] sm:$0xff]
        %v313 = vld [vmem:[%s223 + $0xb0] sm:$0xff]
        %v314 = vld [vmem:[%s223 + $0xb8] sm:$0xff]
        %v315 = vld [vmem:[%s223 + $0xc0] sm:$0xff]
        %v316 = vld [vmem:[%s223 + $0xc8] sm:$0xff]
        %v317 = vld [vmem:[%s223 + $0xd0] sm:$0xff]
        %v318 = vld [vmem:[%s223 + $0xd8] sm:$0xff]
        %v319 = vld [vmem:[%s223 + $0xe0] sm:$0xff]
        %v320 = vld [vmem:[%s223 + $0xe8] sm:$0xff]
        %v321 = vld [vmem:[%s223 + $0xf0] sm:$0xff]
        %v322 = vld [vmem:[%s223 + $0xf8] sm:$0xff]
        %v323 = vld [vmem:[%s257] sm:$0x1]
        %v325 = vlaneseq
        %v326 = vshrl.u32 %v325, 7
        %v327 = vsub.s32 0, %v326
        %v328 = vrot.slane %v323, %v327
        %330 = vmatprep.subr.mxu0 0.0
        %331 = vmatpush1.msra.mxu0 %v291
        %332 = vmatprep.subr.mxu0 0.0
        %333 = vmatpush1.msra.mxu0 %v292
        %334 = vmatprep.subr.mxu0 0.0
        %335 = vmatpush1.msra.mxu0 %v293
        %336 = vmatprep.subr.mxu0 0.0
        %337 = vmatpush1.msra.mxu0 %v294
        %338 = vmatprep.subr.mxu0 0.0
        %339 = vmatpush1.msra.mxu0 %v295
        %340 = vmatprep.subr.mxu0 0.0
        %341 = vmatpush1.msra.mxu0 %v296
        %342 = vmatprep.subr.mxu0 0.0
        %343 = vmatpush1.msra.mxu0 %v297
        %344 = vmatprep.subr.mxu0 0.0
        %345 = vmatpush1.msra.mxu0 %v298
        %346 = vmatprep.subr.mxu0 0.0
        %347 = vmatpush1.msra.mxu0 %v299
        %348 = vmatprep.subr.mxu0 0.0
        %349 = vmatpush1.msra.mxu0 %v300
        %350 = vmatprep.subr.mxu0 0.0
        %351 = vmatpush1.msra.mxu0 %v301
        %352 = vmatprep.subr.mxu0 0.0
        %353 = vmatpush1.msra.mxu0 %v302
        %354 = vmatprep.subr.mxu0 0.0
        %355 = vmatpush1.msra.mxu0 %v303
        %356 = vmatprep.subr.mxu0 0.0
        %357 = vmatpush1.msra.mxu0 %v304
        %358 = vmatprep.subr.mxu0 0.0
        %359 = vmatpush1.msra.mxu0 %v305
        %360 = vmatprep.subr.mxu0 0.0
        %361 = vmatpush1.msra.mxu0 %v306
        %362 = vmatprep.subr.mxu0 0.0
        %363 = vmatpush1.msra.mxu0 %v307
        %364 = vmatprep.subr.mxu0 0.0
        %365 = vmatpush1.msra.mxu0 %v308
        %366 = vmatprep.subr.mxu0 0.0
        %367 = vmatpush1.msra.mxu0 %v309
        %368 = vmatprep.subr.mxu0 0.0
        %369 = vmatpush1.msra.mxu0 %v310
        %370 = vmatprep.subr.mxu0 0.0
        %371 = vmatpush1.msra.mxu0 %v311
        %372 = vmatprep.subr.mxu0 0.0
        %373 = vmatpush1.msra.mxu0 %v312
        %374 = vmatprep.subr.mxu0 0.0
        %375 = vmatpush1.msra.mxu0 %v313
        %376 = vmatprep.subr.mxu0 0.0
        %377 = vmatpush1.msra.mxu0 %v314
        %378 = vmatprep.subr.mxu0 0.0
        %379 = vmatpush1.msra.mxu0 %v315
        %380 = vmatprep.subr.mxu0 0.0
        %381 = vmatpush1.msra.mxu0 %v316
        %382 = vmatprep.subr.mxu0 0.0
        %383 = vmatpush1.msra.mxu0 %v317
        %384 = vmatprep.subr.mxu0 0.0
        %385 = vmatpush1.msra.mxu0 %v318
        %386 = vmatprep.subr.mxu0 0.0
        %387 = vmatpush1.msra.mxu0 %v319
        %388 = vmatprep.subr.mxu0 0.0
        %389 = vmatpush1.msra.mxu0 %v320
        %390 = vmatprep.subr.mxu0 0.0
        %391 = vmatpush1.msra.mxu0 %v321
        %392 = vmatprep.subr.mxu0 0.0
        %393 = vmatpush1.msra.mxu0 %v322
        %394 = vmatprep.mubr.f32.mxu0 %v260
        %395 = vmatmul.mubr.f32.gmra.mrb[0].mxu0 %v259
        %v396 = vpop.f32.mrb[0].mxu0
        %v397 = vadd.f32 %v328, %v396
        %v398 = vpop.f32.mrb[0].mxu0
        %399 = vmatprep.mubr.f32.mxu0 %v262
        %400 = vmatmul.mubr.f32.gmra.mrb[0].mxu0 %v261
        %v401 = vpop.f32.mrb[0].mxu0
        %v402 = vadd.f32 %v328, %v401
        %v403 = vpop.f32.mrb[0].mxu0
        %404 = vmatprep.mubr.f32.mxu0 %v264
        %405 = vmatmul.mubr.f32.gmra.mrb[0].mxu0 %v263
        %v406 = vpop.f32.mrb[0].mxu0
        %v407 = vadd.f32 %v328, %v406
        %v408 = vpop.f32.mrb[0].mxu0
        %409 = vmatprep.mubr.f32.mxu0 %v266
        %410 = vmatmul.mubr.f32.gmra.mrb[0].mxu0 %v265
        %v411 = vpop.f32.mrb[0].mxu0
        %v412 = vadd.f32 %v328, %v411
        %v413 = vpop.f32.mrb[0].mxu0
        %414 = vmatprep.mubr.f32.mxu0 %v268
        %415 = vmatmul.mubr.f32.gmra.mrb[0].mxu0 %v267
        %v416 = vpop.f32.mrb[0].mxu0
        %v417 = vadd.f32 %v328, %v416
        %v418 = vpop.f32.mrb[0].mxu0
        %419 = vmatprep.mubr.f32.mxu0 %v270
        %420 = vmatmul.mubr.f32.gmra.mrb[0].mxu0 %v269
        %v421 = vpop.f32.mrb[0].mxu0
        %v422 = vadd.f32 %v328, %v421
        %v423 = vpop.f32.mrb[0].mxu0
        %424 = vmatprep.mubr.f32.mxu0 %v272
        %425 = vmatmul.mubr.f32.gmra.mrb[0].mxu0 %v271
        %v426 = vpop.f32.mrb[0].mxu0
        %v427 = vadd.f32 %v328, %v426
        %v428 = vpop.f32.mrb[0].mxu0
        %429 = vmatprep.mubr.f32.mxu0 %v274
        %430 = vmatmul.mubr.f32.gmra.mrb[0].mxu0 %v273
        %v431 = vpop.f32.mrb[0].mxu0
        %v432 = vadd.f32 %v328, %v431
        %v433 = vpop.f32.mrb[0].mxu0
        %434 = vmatprep.mubr.f32.mxu0 %v276
        %435 = vmatmul.mubr.f32.gmra.mrb[0].mxu0 %v275
        %v436 = vpop.f32.mrb[0].mxu0
        %v437 = vadd.f32 %v328, %v436
        %v438 = vpop.f32.mrb[0].mxu0
        %439 = vmatprep.mubr.f32.mxu0 %v278
        %440 = vmatmul.mubr.f32.gmra.mrb[0].mxu0 %v277
        %v441 = vpop.f32.mrb[0].mxu0
        %v442 = vadd.f32 %v328, %v441
        %v443 = vpop.f32.mrb[0].mxu0
        %444 = vmatprep.mubr.f32.mxu0 %v280
        %445 = vmatmul.mubr.f32.gmra.mrb[0].mxu0 %v279
        %v446 = vpop.f32.mrb[0].mxu0
        %v447 = vadd.f32 %v328, %v446
        %v448 = vpop.f32.mrb[0].mxu0
        %449 = vmatprep.mubr.f32.mxu0 %v282
        %450 = vmatmul.mubr.f32.gmra.mrb[0].mxu0 %v281
        %v451 = vpop.f32.mrb[0].mxu0
        %v452 = vadd.f32 %v328, %v451
        %v453 = vpop.f32.mrb[0].mxu0
        %454 = vmatprep.mubr.f32.mxu0 %v284
        %455 = vmatmul.mubr.f32.gmra.mrb[0].mxu0 %v283
        %v456 = vpop.f32.mrb[0].mxu0
        %v457 = vadd.f32 %v328, %v456
        %v458 = vpop.f32.mrb[0].mxu0
        %459 = vmatprep.mubr.f32.mxu0 %v286
        %460 = vmatmul.mubr.f32.gmra.mrb[0].mxu0 %v285
        %v461 = vpop.f32.mrb[0].mxu0
        %v462 = vadd.f32 %v328, %v461
        %v463 = vpop.f32.mrb[0].mxu0
        %464 = vmatprep.mubr.f32.mxu0 %v288
        %465 = vmatmul.mubr.f32.gmra.mrb[0].mxu0 %v287
        %v466 = vpop.f32.mrb[0].mxu0
        %v467 = vadd.f32 %v328, %v466
        %v468 = vpop.f32.mrb[0].mxu0
        %469 = vmatprep.mubr.f32.mxu0 %v290
        %470 = vmatmul.mubr.f32.gmra.mrb[0].mxu0 %v289
        %v471 = vpop.f32.mrb[0].mxu0
        %v472 = vadd.f32 %v328, %v471
        %v473 = vpop.f32.mrb[0].mxu0
        %474 = vdwg.mxu0
        %475 = vst [vmem:[%s253] sm:$0xff] %v397
        %476 = vst [vmem:[%s253 + $0x8] sm:$0xff] %v402
        %477 = vst [vmem:[%s253 + $0x10] sm:$0xff] %v407
        %478 = vst [vmem:[%s253 + $0x18] sm:$0xff] %v412
        %479 = vst [vmem:[%s253 + $0x20] sm:$0xff] %v417
        %480 = vst [vmem:[%s253 + $0x28] sm:$0xff] %v422
        %481 = vst [vmem:[%s253 + $0x30] sm:$0xff] %v427
        %482 = vst [vmem:[%s253 + $0x38] sm:$0xff] %v432
        %483 = vst [vmem:[%s253 + $0x40] sm:$0xff] %v437
        %484 = vst [vmem:[%s253 + $0x48] sm:$0xff] %v442
        %485 = vst [vmem:[%s253 + $0x50] sm:$0xff] %v447
        %486 = vst [vmem:[%s253 + $0x58] sm:$0xff] %v452
        %487 = vst [vmem:[%s253 + $0x60] sm:$0xff] %v457
        %488 = vst [vmem:[%s253 + $0x68] sm:$0xff] %v462
        %489 = vst [vmem:[%s253 + $0x70] sm:$0xff] %v467
        %490 = vst [vmem:[%s253 + $0x78] sm:$0xff] %v472
        %s491 = sand.u32 %s123, 1
        %s492 = scalar_lea.sflag [#allocation4], %s491
        %s493 = sand.u32 %s123, 1
        %s494 = smul.addr %s493, 128
        %s495 = scalar_lea.vmem [#allocation7], %s494
        // Predicated region
        $region41: #{tpu_custom_call.1} parent=31 // pred_check
          %p496 = pneg %p133
        $region42: #{tpu_custom_call.1} parent=31 // pred_check_branch
          %498 = sbr.rel (%p496) target = $region44
        $region43: #{tpu_custom_call.1} parent=31 // pred_region
          %s499 = smul.u32 16, %s27
          %s501 = ssub.s32 2048, 2048
          %502 = vsyncadd %s492, %s501
          %s503 = smul.addr %s499, 2
          %s504 = sadd.s32 %s28, %s503
          %s505 = smul.addr %s504, 128
          %s506 = scalar_lea.hbm %s3, %s505
          %s507 = sshll.u32 %s495, 4
          %s508 = int_to_ptr.vmem [resolvable:$true] %s507
          %513 = dma.vmem_to_hbm [thread:$0]  %s508, 2048, %s506, %s492, 128, 256, 8
        $region44: #{tpu_custom_call.1} parent=31 // pred_fallthru
          _
      $region32: #{tpu_custom_call.1} parent=5 // pred_fallthru
        _
      %p514 = scmp.le.s32.totalorder 2, %s18
      // Predicated region
      $region45: #{tpu_custom_call.1} parent=5 // pred_check
        %p515 = pneg %p514
      $region46: #{tpu_custom_call.1} parent=5 // pred_check_branch
        %517 = sbr.rel (%p515) target = $region48
      $region47: #{tpu_custom_call.1} parent=5 // pred_region
        %s518 = ssub.s32 %s18, 2
        // Predicated region
        $region49: #{tpu_custom_call.1} parent=47 // pred_check
          %p519 = pneg %p139
        $region50: #{tpu_custom_call.1} parent=47 // pred_check_branch
          %521 = sbr.rel (%p519) target = $region52
        $region51: #{tpu_custom_call.1} parent=47 // pred_region
          %s522 = sand.u32 %s124, 1
          %s523 = scalar_lea.sflag [#allocation4], %s522
          %s524 = sand.u32 %s124, 1
          %s525 = smul.addr %s524, 128
          %s526 = scalar_lea.vmem [#allocation7], %s525
          %527 = dma.done %s523, 2048
        $region52: #{tpu_custom_call.1} parent=47 // pred_fallthru
          _
      $region48: #{tpu_custom_call.1} parent=5 // pred_fallthru
        _
    $region6: #{tpu_custom_call.1} parent=1 // loop_footer
      %s22 = sadd.s32 1, %s18
    $region7: #{tpu_custom_call.1} parent=1 // loop_footer_branch
      %17 = sbr.rel target = $region3
    $region8: #{tpu_custom_call.1} parent=1 // loop_exit
      _
    %528 = vsyncpa [#allocation3], 1
    %s529 = scalar_lea.sflag [#allocation3], 1
    %530 = vsyncpa %s529, 1
    %531 = vsyncpa [#allocation6], 1
    %s532 = scalar_lea.sflag [#allocation6], 1
    %533 = vsyncpa %s532, 1
    %534 = vsyncpa [#allocation4], 1
    %s535 = scalar_lea.sflag [#allocation4], 1
    %536 = vsyncpa %s535, 1

</llo_original>
